<compile_context>
chip_gen: v7x
topology: tpu7x:2x2x1
jax: 0.10.0
libtpu: 0.0.40
codegen_flags: <defaults>
</compile_context>

<pallas_src>
import functools

import jax
import jax.numpy as jnp
from jax.experimental import pallas as pl
from jax.experimental.pallas import tpu as pltpu


# ---------------------------------------------------------------------------
# Fused kernel: one matmul for (current + K old) heads, then per-head KL.
# Runs once (no grid) — everything fits VMEM at these shapes.
# ---------------------------------------------------------------------------
def _lwf_fused_kernel(x_ref, w_all_ref, b_all_ref, out_ref, *,
                      num_old, num_classes, inv_temperature):
    # Single lane-dense MXU matmul: [B, H] @ [H, (K+1)*C] -> [B, (K+1)*C],
    # bf16 operands, f32 accumulation; 1/T folded into one multiply.
    logits = (jnp.dot(x_ref[...], w_all_ref[...],
                      preferred_element_type=jnp.float32)
              + b_all_ref[...].astype(jnp.float32)) * inv_temperature

    C = num_classes

    # Current-head log-softmax (log q): computed ONCE, reused for every head.
    cur = logits[:, :C]
    cur_s = cur - jnp.max(cur, axis=1, keepdims=True)
    log_q = cur_s - jnp.log(jnp.sum(jnp.exp(cur_s), axis=1, keepdims=True))

    total = jnp.float32(0.0)
    for k in range(num_old):  # static unroll — K is a small Python constant
        old = logits[:, (k + 1) * C:(k + 2) * C]
        old_s = old - jnp.max(old, axis=1, keepdims=True)
        old_exp = jnp.exp(old_s)
        old_sum = jnp.sum(old_exp, axis=1, keepdims=True)
        # KL(p || q) summed over batch, p = softmax(old_s):
        #   sum_ij p*(log p - log q)
        # = sum_i (1/old_sum_i) * sum_j old_exp*(old_s - log_q)
        #   - sum_i log(old_sum_i)                    (since sum_j p = 1)
        row = jnp.sum(old_exp * (old_s - log_q), axis=1, keepdims=True)
        total = total + (jnp.sum(row * pl.reciprocal(old_sum))  # exact recip
                         - jnp.sum(jnp.log(old_sum)))

    out_ref[0, 0] = total


def lwf_distillation_loss(x, current_params, old_params_list, *,
                          temperature=2.0, lambda_old=1.0):
    """x: [B, H]; params: (W [H, C], b [C]). Returns scalar LwF loss."""
    w_cur, b_cur = current_params
    B, H = x.shape
    C = w_cur.shape[1]
    K = len(old_params_list)
    if K == 0:
        return jnp.float32(0.0)

    # Fuse current + all K old heads into one [H, (K+1)*C] weight slab and a
    # [1, (K+1)*C] bias row; stream everything as bf16 (f32 MXU accumulation).
    w_all = jnp.concatenate(
        [w_cur] + [w for (w, _) in old_params_list], axis=1).astype(jnp.bfloat16)
    b_all = jnp.concatenate(
        [b_cur.reshape(1, C)] + [b.reshape(1, C) for (_, b) in old_params_list],
        axis=1).astype(jnp.bfloat16)
    x_bf = x.astype(jnp.bfloat16)

    kernel = functools.partial(
        _lwf_fused_kernel, num_old=K, num_classes=C,
        inv_temperature=float(1.0 / temperature))

    acc = pl.pallas_call(
        kernel,
        out_shape=jax.ShapeDtypeStruct((1, 1), jnp.float32),
        in_specs=[
            pl.BlockSpec(memory_space=pltpu.MemorySpace.VMEM),  # x        [B, H]
            pl.BlockSpec(memory_space=pltpu.MemorySpace.VMEM),  # W_all    [H, (K+1)*C]
            pl.BlockSpec(memory_space=pltpu.MemorySpace.VMEM),  # b_all    [1, (K+1)*C]
        ],
        out_specs=pl.BlockSpec(memory_space=pltpu.MemorySpace.SMEM),  # scalar
    )(x_bf, w_all, b_all)

    T = float(temperature)
    # T^2, batchmean (1/B) and lambda_old applied once, outside the kernel.
    return (lambda_old * T * T / B) * acc[0, 0]


# ---------------------------------------------------------------------------
# LwFLoss wrapper (parameter bookkeeping, task filtering)
# ---------------------------------------------------------------------------
class LwFLossPallas:
    def __init__(self, temperature=2.0, lambda_old=1.0):
        self.temperature = temperature
        self.lambda_old = lambda_old
        self.old_task_models = {}  # task_id -> (W, b)

    def register_task(self, task_id, params):
        self.old_task_models[task_id] = params

    def __call__(self, current_params, x, current_task_id=None):
        if not self.old_task_models:
            return jnp.float32(0.0)
        old_params = [
            p for tid, p in self.old_task_models.items()
            if not (current_task_id is not None and tid == current_task_id)
        ]
        if not old_params:
            return jnp.float32(0.0)
        return lwf_distillation_loss(
            x, current_params, old_params,
            temperature=self.temperature, lambda_old=self.lambda_old,
        )


if __name__ == "__main__":
    B, H, C = 8, 32, 16
    key = jax.random.PRNGKey(0)
    kx, kw0, kb0, kw1, kb1, kw2, kb2 = jax.random.split(key, 7)

    x = jax.random.normal(kx, (B, H), dtype=jnp.float32)

    # deterministic synthetic linear "models": current + two old-task snapshots
    current_params = (
        jax.random.normal(kw0, (H, C), dtype=jnp.float32) * 0.1,
        jax.random.normal(kb0, (C,), dtype=jnp.float32) * 0.1,
    )
    old_params_0 = (
        jax.random.normal(kw1, (H, C), dtype=jnp.float32) * 0.1,
        jax.random.normal(kb1, (C,), dtype=jnp.float32) * 0.1,
    )
    old_params_1 = (
        jax.random.normal(kw2, (H, C), dtype=jnp.float32) * 0.1,
        jax.random.normal(kb2, (C,), dtype=jnp.float32) * 0.1,
    )

    lwf = LwFLossPallas(temperature=2.0, lambda_old=1.0)
    lwf.register_task(0, old_params_0)
    lwf.register_task(1, old_params_1)

    loss = lwf(current_params, x, current_task_id=None)
    loss = jax.block_until_ready(loss)

    # pure-JAX reference check.  The kernel streams bf16 operands, so compare
    # against the reference evaluated on the same bf16-rounded values.
    def bf16_round(a):
        return a.astype(jnp.bfloat16).astype(jnp.float32)

    def ref_logits(p, xv):
        return xv @ bf16_round(p[0]) + bf16_round(p[1])

    T = 2.0
    x_r = bf16_round(x)
    cur = ref_logits(current_params, x_r)
    ref = 0.0
    for p_old in (old_params_0, old_params_1):
        old = ref_logits(p_old, x_r)
        log_q = jax.nn.log_softmax(cur / T, axis=1)
        pdist = jax.nn.softmax(old / T, axis=1)
        log_p = jax.nn.log_softmax(old / T, axis=1)
        ref += jnp.sum(pdist * (log_p - log_q)) / B * T**2
    assert jnp.allclose(loss, ref, rtol=1e-3, atol=1e-4), (loss, ref)

    print("KERNEL_OK")
</pallas_src>

<mosaic_0001>
module attributes {stable_mosaic.version = 11 : i64} {
  func.func @_lwf_fused_kernel(%arg0: memref<8x32xbf16, #tpu.memory_space<vmem>>, %arg1: memref<32x48xbf16, #tpu.memory_space<vmem>>, %arg2: memref<1x48xbf16, #tpu.memory_space<vmem>>, %arg3: memref<1x1xf32, #tpu.memory_space<smem>>) attributes {dimension_semantics = [], scalar_prefetch = 0 : i64, scratch_operands = 0 : i64, tpu.core_type = #tpu.core_type<tc>} {
    %c0 = arith.constant 0 : index
    %c0_0 = arith.constant 0 : index
    %0 = vector.load %arg0[%c0, %c0_0] : memref<8x32xbf16, #tpu.memory_space<vmem>>, vector<8x32xbf16>
    %c0_1 = arith.constant 0 : index
    %c0_2 = arith.constant 0 : index
    %1 = vector.load %arg1[%c0_1, %c0_2] : memref<32x48xbf16, #tpu.memory_space<vmem>>, vector<32x48xbf16>
    %cst = arith.constant dense<0.000000e+00> : vector<8x48xf32>
    %2 = tpu.matmul %0, %1, %cst {dimension_numbers = #tpu.dot_dimension_numbers<[1], [0], [0], [1], [0, 0, 1, 1], [], []>} : vector<8x32xbf16>, vector<32x48xbf16>, vector<8x48xf32> -> vector<8x48xf32>
    %c0_3 = arith.constant 0 : index
    %c0_4 = arith.constant 0 : index
    %3 = vector.load %arg2[%c0_3, %c0_4] : memref<1x48xbf16, #tpu.memory_space<vmem>>, vector<1x48xbf16>
    %4 = arith.extf %3 : vector<1x48xbf16> to vector<1x48xf32>
    %5 = vector.broadcast %4 : vector<1x48xf32> to vector<8x48xf32>
    %6 = arith.addf %2, %5 : vector<8x48xf32>
    %cst_5 = arith.constant 5.000000e-01 : f32
    %7 = vector.broadcast %cst_5 : f32 to vector<8x48xf32>
    %8 = arith.mulf %6, %7 : vector<8x48xf32>
    %9 = vector.extract_strided_slice %8 {offsets = [0, 0], sizes = [8, 16], strides = [1, 1]} : vector<8x48xf32> to vector<8x16xf32>
    %cst_6 = arith.constant dense<0xFF800000> : vector<8xf32>
    %10 = vector.multi_reduction <maximumf>, %9, %cst_6 [1] : vector<8x16xf32> to vector<8xf32>
    %11 = vector.shape_cast %10 : vector<8xf32> to vector<8x1xf32>
    %12 = vector.broadcast %11 : vector<8x1xf32> to vector<8x16xf32>
    %13 = arith.subf %9, %12 : vector<8x16xf32>
    %14 = math.exp %13 : vector<8x16xf32>
    %cst_7 = arith.constant dense<0.000000e+00> : vector<8xf32>
    %15 = vector.multi_reduction <add>, %14, %cst_7 [1] : vector<8x16xf32> to vector<8xf32>
    %16 = vector.shape_cast %15 : vector<8xf32> to vector<8x1xf32>
    %17 = math.log %16 : vector<8x1xf32>
    %18 = vector.broadcast %17 : vector<8x1xf32> to vector<8x16xf32>
    %19 = arith.subf %13, %18 : vector<8x16xf32>
    %20 = vector.extract_strided_slice %8 {offsets = [0, 16], sizes = [8, 16], strides = [1, 1]} : vector<8x48xf32> to vector<8x16xf32>
    %cst_8 = arith.constant dense<0xFF800000> : vector<8xf32>
    %21 = vector.multi_reduction <maximumf>, %20, %cst_8 [1] : vector<8x16xf32> to vector<8xf32>
    %22 = vector.shape_cast %21 : vector<8xf32> to vector<8x1xf32>
    %23 = vector.broadcast %22 : vector<8x1xf32> to vector<8x16xf32>
    %24 = arith.subf %20, %23 : vector<8x16xf32>
    %25 = math.exp %24 : vector<8x16xf32>
    %cst_9 = arith.constant dense<0.000000e+00> : vector<8xf32>
    %26 = vector.multi_reduction <add>, %25, %cst_9 [1] : vector<8x16xf32> to vector<8xf32>
    %27 = vector.shape_cast %26 : vector<8xf32> to vector<8x1xf32>
    %28 = arith.subf %24, %19 : vector<8x16xf32>
    %29 = arith.mulf %25, %28 : vector<8x16xf32>
    %cst_10 = arith.constant dense<0.000000e+00> : vector<8xf32>
    %30 = vector.multi_reduction <add>, %29, %cst_10 [1] : vector<8x16xf32> to vector<8xf32>
    %31 = vector.shape_cast %30 : vector<8xf32> to vector<8x1xf32>
    %32 = tpu.reciprocal %27 : vector<8x1xf32> -> vector<8x1xf32>
    %33 = arith.mulf %31, %32 : vector<8x1xf32>
    %34 = vector.shape_cast %33 : vector<8x1xf32> to vector<1x8x1xf32>
    %cst_11 = arith.constant dense<0.000000e+00> : vector<1xf32>
    %35 = vector.multi_reduction <add>, %34, %cst_11 [1, 2] : vector<1x8x1xf32> to vector<1xf32>
    %36 = vector.shape_cast %35 : vector<1xf32> to vector<1x1x1xf32>
    %37 = vector.extract %36[0, 0, 0] : f32 from vector<1x1x1xf32>
    %38 = math.log %27 : vector<8x1xf32>
    %39 = vector.shape_cast %38 : vector<8x1xf32> to vector<1x8x1xf32>
    %cst_12 = arith.constant dense<0.000000e+00> : vector<1xf32>
    %40 = vector.multi_reduction <add>, %39, %cst_12 [1, 2] : vector<1x8x1xf32> to vector<1xf32>
    %41 = vector.shape_cast %40 : vector<1xf32> to vector<1x1x1xf32>
    %42 = vector.extract %41[0, 0, 0] : f32 from vector<1x1x1xf32>
    %43 = arith.subf %37, %42 : f32
    %cst_13 = arith.constant 0.000000e+00 : f32
    %44 = arith.addf %cst_13, %43 : f32
    %45 = vector.extract_strided_slice %8 {offsets = [0, 32], sizes = [8, 16], strides = [1, 1]} : vector<8x48xf32> to vector<8x16xf32>
    %cst_14 = arith.constant dense<0xFF800000> : vector<8xf32>
    %46 = vector.multi_reduction <maximumf>, %45, %cst_14 [1] : vector<8x16xf32> to vector<8xf32>
    %47 = vector.shape_cast %46 : vector<8xf32> to vector<8x1xf32>
    %48 = vector.broadcast %47 : vector<8x1xf32> to vector<8x16xf32>
    %49 = arith.subf %45, %48 : vector<8x16xf32>
    %50 = math.exp %49 : vector<8x16xf32>
    %cst_15 = arith.constant dense<0.000000e+00> : vector<8xf32>
    %51 = vector.multi_reduction <add>, %50, %cst_15 [1] : vector<8x16xf32> to vector<8xf32>
    %52 = vector.shape_cast %51 : vector<8xf32> to vector<8x1xf32>
    %53 = arith.subf %49, %19 : vector<8x16xf32>
    %54 = arith.mulf %50, %53 : vector<8x16xf32>
    %cst_16 = arith.constant dense<0.000000e+00> : vector<8xf32>
    %55 = vector.multi_reduction <add>, %54, %cst_16 [1] : vector<8x16xf32> to vector<8xf32>
    %56 = vector.shape_cast %55 : vector<8xf32> to vector<8x1xf32>
    %57 = tpu.reciprocal %52 : vector<8x1xf32> -> vector<8x1xf32>
    %58 = arith.mulf %56, %57 : vector<8x1xf32>
    %59 = vector.shape_cast %58 : vector<8x1xf32> to vector<1x8x1xf32>
    %cst_17 = arith.constant dense<0.000000e+00> : vector<1xf32>
    %60 = vector.multi_reduction <add>, %59, %cst_17 [1, 2] : vector<1x8x1xf32> to vector<1xf32>
    %61 = vector.shape_cast %60 : vector<1xf32> to vector<1x1x1xf32>
    %62 = vector.extract %61[0, 0, 0] : f32 from vector<1x1x1xf32>
    %63 = math.log %52 : vector<8x1xf32>
    %64 = vector.shape_cast %63 : vector<8x1xf32> to vector<1x8x1xf32>
    %cst_18 = arith.constant dense<0.000000e+00> : vector<1xf32>
    %65 = vector.multi_reduction <add>, %64, %cst_18 [1, 2] : vector<1x8x1xf32> to vector<1xf32>
    %66 = vector.shape_cast %65 : vector<1xf32> to vector<1x1x1xf32>
    %67 = vector.extract %66[0, 0, 0] : f32 from vector<1x1x1xf32>
    %68 = arith.subf %62, %67 : f32
    %69 = arith.addf %44, %68 : f32
    %c0_19 = arith.constant 0 : index
    %c0_20 = arith.constant 0 : index
    %70 = memref.load %arg3[%c0_19, %c0_20] : memref<1x1xf32, #tpu.memory_space<smem>>
    memref.store %69, %arg3[%c0_19, %c0_20] : memref<1x1xf32, #tpu.memory_space<smem>>
    return
  }
}

</mosaic_0001>

<llo_original>
// kernel: tpu_custom_call.1
$region0: #{tpu_custom_call.1}
  #allocation0 [shape = 'u32[]', space=smem, size = 0x4, offset = 0x4, fixed_abs, tag = 'smem constant byte address 0x4 - core index']
  #allocation1 [shape = 'u32[144,128]{1,0:T(1,128)}', space=vmem, size = 0x12000, scoped, tag = 'internal scratch']
  %s0 = inlined_call_operand.hbm [shape: bf16[8,32], index: 0, kind: input, shape index: {}]
  %s1 = inlined_call_operand.hbm [shape: bf16[32,48], index: 1, kind: input, shape index: {}]
  %s2 = inlined_call_operand.vmem [shape: bf16[1,48], index: 2, kind: input, shape index: {}]
  %s3 = inlined_call_operand.hbm [shape: f32[1,1], index: 3, kind: output, shape index: {}]
  %s4 = sld [smem:[#allocation0]]
  $region30: #{tpu_custom_call.1} parent=0
    _
  %s6 = ssub.s32 1, %s4
  %s7 = scalar_select 0, %s6, %s4
  $region1: #{tpu_custom_call.1} parent=0
    #allocation2 [shape = 'u8[2048]{0}', space=vmem, size = 0x800, scoped, tag = 'input window, operand 0, single buffered']
    #allocation3 [shape = 's32[1]{0}', space=sflag, size = 0x4, scoped, tag = 'scoped memory for tpu_custom_call.1']
    #allocation4 [shape = 's32[1]{0}', space=sflag, size = 0x4, scoped, tag = 'scoped memory for tpu_custom_call.1']
    #allocation5 [shape = 'u8[8192]{0}', space=vmem, size = 0x2000, scoped, tag = 'input window, operand 1, single buffered']
    #allocation6 [shape = 's32[1]{0}', space=sflag, size = 0x4, scoped, tag = 'scoped memory for tpu_custom_call.1']
    #allocation7 [shape = 'u8[512]{0}', space=smem, size = 0x200, scoped, tag = 'output window, operand 0, single buffered']
    %8 = vsyncpa [#allocation3], 0
    %9 = vsyncpa [#allocation6], 0
    %10 = vsyncpa [#allocation4], 0
    // Predicated region
    $region2: #{tpu_custom_call.1} parent=1 // pred_check
      _
    $region3: #{tpu_custom_call.1} parent=1 // pred_check_branch
      %12 = sbr.rel (0) target = $region5
    $region4: #{tpu_custom_call.1} parent=1 // pred_region
      %s14 = ssub.s32 64, 64
      %15 = vsyncadd [#allocation3], %s14
      %s17 = sshll.u32 [#allocation2], 4
      %s18 = int_to_ptr.vmem [resolvable:$true] %s17
      %20 = dma.hbm_to_vmem [thread:$0]  %s0, 64, %s18, [#allocation3]
    $region5: #{tpu_custom_call.1} parent=1 // pred_fallthru
      _
    // Predicated region
    $region6: #{tpu_custom_call.1} parent=1 // pred_check
      _
    $region7: #{tpu_custom_call.1} parent=1 // pred_check_branch
      %22 = sbr.rel (0) target = $region9
    $region8: #{tpu_custom_call.1} parent=1 // pred_region
      %s24 = ssub.s32 256, 256
      %25 = vsyncadd [#allocation6], %s24
      %s26 = sshll.u32 [#allocation5], 4
      %s27 = int_to_ptr.vmem [resolvable:$true] %s26
      %32 = dma.hbm_to_vmem [thread:$0]  %s1, 256, %s27, [#allocation6], 64, 64, 4
    $region9: #{tpu_custom_call.1} parent=1 // pred_fallthru
      _
    // Predicated region
    $region10: #{tpu_custom_call.1} parent=1 // pred_check
      _
    $region11: #{tpu_custom_call.1} parent=1 // pred_check_branch
      %34 = sbr.rel (0) target = $region13
    $region12: #{tpu_custom_call.1} parent=1 // pred_region
      _
    $region13: #{tpu_custom_call.1} parent=1 // pred_fallthru
      _
    // Predicated region
    $region14: #{tpu_custom_call.1} parent=1 // pred_check
      _
    $region15: #{tpu_custom_call.1} parent=1 // pred_check_branch
      %36 = sbr.rel (0) target = $region17
    $region16: #{tpu_custom_call.1} parent=1 // pred_region
      %37 = dma.done [#allocation3], 64
    $region17: #{tpu_custom_call.1} parent=1 // pred_fallthru
      _
    // Predicated region
    $region18: #{tpu_custom_call.1} parent=1 // pred_check
      _
    $region19: #{tpu_custom_call.1} parent=1 // pred_check_branch
      %39 = sbr.rel (0) target = $region21
    $region20: #{tpu_custom_call.1} parent=1 // pred_region
      %40 = dma.done [#allocation6], 256
    $region21: #{tpu_custom_call.1} parent=1 // pred_fallthru
      _
    %v42 = vld [vmem:[#allocation2] sm:$0xf]
    %v43 = vld [vmem:[#allocation5] sm:$0xf]
    %v44 = vld [vmem:[#allocation5 + $0x4] sm:$0xf]
    %v45 = vld [vmem:[#allocation5 + $0x8] sm:$0xf]
    %v46 = vld [vmem:[#allocation5 + $0xc] sm:$0xf]
    %v47 = vld [vmem:[%s2] sm:$0x1]
    %v48 = vunpack.c.l.bf16 %v47
    %v49 = vlaneseq
    %v50 = vshrl.u32 %v49, 7
    %v51 = vsub.s32 0, %v50
    %v52 = vrot.slane %v48, %v51
    %v57 = vunpack.c.l.b16 %v43
    %v58 = vunpack.c.l.b16 %v44
    %v59 = vunpack.c.l.b16 %v45
    %v60 = vunpack.c.l.b16 %v46
    %v61 = vpack.c.b16 %v58, %v57
    %v62 = vpack.c.b16 %v60, %v59
    %vm65 = vcmask 261120
    %v67 = vsel %vm65, %v42, 0
    %69 = vmatprep.subr.bf16.mxu0 0
    %70 = vmatpush1.bf16.msra.mxu0 %v61
    %71 = vmatprep.subr.bf16.mxu0 0
    %72 = vmatpush1.bf16.msra.mxu0 %v62
    %73 = vmatprep.subr.bf16.mxu0 0
    %74 = vmatpush1.bf16.msra.mxu0 0
    %75 = vmatprep.subr.bf16.mxu0 0
    %76 = vmatpush1.bf16.msra.mxu0 0
    %77 = vmatprep.subr.bf16.mxu0 0
    %78 = vmatpush1.bf16.msra.mxu0 0
    %79 = vmatprep.subr.bf16.mxu0 0
    %80 = vmatpush1.bf16.msra.mxu0 0
    %81 = vmatprep.subr.bf16.mxu0 0
    %82 = vmatpush1.bf16.msra.mxu0 0
    %83 = vmatprep.subr.bf16.mxu0 0
    %84 = vmatpush1.bf16.msra.mxu0 0
    %85 = vmatprep.subr.bf16.mxu0 0
    %86 = vmatpush1.bf16.msra.mxu0 0
    %87 = vmatprep.subr.bf16.mxu0 0
    %88 = vmatpush1.bf16.msra.mxu0 0
    %89 = vmatprep.subr.bf16.mxu0 0
    %90 = vmatpush1.bf16.msra.mxu0 0
    %91 = vmatprep.subr.bf16.mxu0 0
    %92 = vmatpush1.bf16.msra.mxu0 0
    %93 = vmatprep.subr.bf16.mxu0 0
    %94 = vmatpush1.bf16.msra.mxu0 0
    %95 = vmatprep.subr.bf16.mxu0 0
    %96 = vmatpush1.bf16.msra.mxu0 0
    %97 = vmatprep.subr.bf16.mxu0 0
    %98 = vmatpush1.bf16.msra.mxu0 0
    %99 = vmatprep.subr.bf16.mxu0 0
    %100 = vmatpush1.bf16.msra.mxu0 0
    %101 = vmatprep.mubr.bf16.mxu0 0
    %102 = vmatmul.mubr.bf16.gmra.mrb[0].mxu0 %v67
    %v103 = vpop.f32.mrb[0].mxu0
    %v104 = vadd.f32 %v52, %v103
    %v105 = vpop.f32.mrb[0].mxu0
    %v106 = vpop.f32.mrb[0].mxu0
    %v107 = vpop.f32.mrb[0].mxu0
    %108 = vdwg.mxu0
    %v109 = vmul.f32 %v104, 0.5
    %vm110 = vcmask 130048
    %v111 = vsel %vm110, %v109, -inf
    %112 = vmax.xlane.f32.xlu0 %v111
    %v113 = vpop.xlane.xlu0 %112
    %v114 = vsub.f32 %v109, %v113
    %v115 = vmul.f32 %v114, 1.442695
    %v116 = vpow.pop %v115
    %v117 = vsel %vm110, %v116, 0.0
    %118 = vadd.xlane.f32.xlu0 %v117
    %v119 = vpop.xlane.xlu0 %118
    %v120 = vlog2.pop %v119
    %v121 = vmul.f32 %v120, 0.6931472
    %v122 = vsub.f32 %v114, %v121
    %vm123 = vcmask 261248
    %v124 = vsel %vm123, %v109, -inf
    %125 = vmax.xlane.f32.xlu0 %v124
    %v126 = vpop.xlane.xlu0 %125
    %v127 = vsub.f32 %v109, %v126
    %v128 = vmul.f32 %v127, 1.442695
    %v129 = vpow.pop %v128
    %131 = vrot.lane.b32.xlu0 %v129, 112
    %v132 = vpop.permute.xlu0 %131
    %v134 = vsel %vm110, %v132, 0.0
    %135 = vadd.xlane.f32.xlu0 %v134
    %v136 = vpop.xlane.xlu0 %135
    %138 = vrot.lane.b32.xlu0 %v122, 16
    %v139 = vpop.permute.xlu0 %138
    %v141 = vsub.f32 %v127, %v139
    %v142 = vmul.f32 %v129, %v141
    %144 = vrot.lane.b32.xlu0 %v142, 112
    %v145 = vpop.permute.xlu0 %144
    %v147 = vsel %vm110, %v145, 0.0
    %148 = vadd.xlane.f32.xlu0 %v147
    %v149 = vpop.xlane.xlu0 %148
    %v150 = vrcp.pop %v136
    %v151 = vmul.f32 %v149, %v150
    %vm152 = vcmask 7168
    %v153 = vsel %vm152, %v151, 0.0
    %154 = vadd.xlane.f32.xlu0 %v153
    %v155 = vpop.xlane.xlu0 %154
    %v156 = vrot.slane %v155, 4
    %v157 = vadd.f32 %v155, %v156
    %v158 = vrot.slane %v157, 2
    %v159 = vadd.f32 %v157, %v158
    %v160 = vrot.slane %v159, 1
    %v161 = vadd.f32 %v159, %v160
    %s162 = vtos %v161
    %v163 = vlog2.pop %v136
    %v164 = vmul.f32 %v163, 0.6931472
    %v165 = vsel %vm152, %v164, 0.0
    %166 = vadd.xlane.f32.xlu0 %v165
    %v167 = vpop.xlane.xlu0 %166
    %v168 = vrot.slane %v167, 4
    %v169 = vadd.f32 %v167, %v168
    %v170 = vrot.slane %v169, 2
    %v171 = vadd.f32 %v169, %v170
    %v172 = vrot.slane %v171, 1
    %v173 = vadd.f32 %v171, %v172
    %s174 = vtos %v173
    %s175 = ssub.f32 %s162, %s174
    %s176 = sadd.f32 %s175, 0.0
    %vm177 = vcmask 392448
    %v178 = vsel %vm177, %v109, -inf
    %179 = vmax.xlane.f32.xlu0 %v178
    %v180 = vpop.xlane.xlu0 %179
    %v181 = vsub.f32 %v109, %v180
    %v182 = vmul.f32 %v181, 1.442695
    %v183 = vpow.pop %v182
    %185 = vrot.lane.b32.xlu0 %v183, 96
    %v186 = vpop.permute.xlu0 %185
    %v188 = vsel %vm110, %v186, 0.0
    %189 = vadd.xlane.f32.xlu0 %v188
    %v190 = vpop.xlane.xlu0 %189
    %191 = vrot.lane.b32.xlu0 %v122, 32
    %v192 = vpop.permute.xlu0 %191
    %v194 = vsub.f32 %v181, %v192
    %v195 = vmul.f32 %v183, %v194
    %197 = vrot.lane.b32.xlu0 %v195, 96
    %v198 = vpop.permute.xlu0 %197
    %v200 = vsel %vm110, %v198, 0.0
    %201 = vadd.xlane.f32.xlu0 %v200
    %v202 = vpop.xlane.xlu0 %201
    %v203 = vrcp.pop %v190
    %v204 = vmul.f32 %v202, %v203
    %v205 = vsel %vm152, %v204, 0.0
    %206 = vadd.xlane.f32.xlu0 %v205
    %v207 = vpop.xlane.xlu0 %206
    %v208 = vrot.slane %v207, 4
    %v209 = vadd.f32 %v207, %v208
    %v210 = vrot.slane %v209, 2
    %v211 = vadd.f32 %v209, %v210
    %v212 = vrot.slane %v211, 1
    %v213 = vadd.f32 %v211, %v212
    %s214 = vtos %v213
    %v215 = vlog2.pop %v190
    %v216 = vmul.f32 %v215, 0.6931472
    %v217 = vsel %vm152, %v216, 0.0
    %218 = vadd.xlane.f32.xlu0 %v217
    %v219 = vpop.xlane.xlu0 %218
    %v220 = vrot.slane %v219, 4
    %v221 = vadd.f32 %v219, %v220
    %v222 = vrot.slane %v221, 2
    %v223 = vadd.f32 %v221, %v222
    %v224 = vrot.slane %v223, 1
    %v225 = vadd.f32 %v223, %v224
    %s226 = vtos %v225
    %s227 = ssub.f32 %s214, %s226
    %s228 = sadd.f32 %s176, %s227
    %s229 = scalar_lea.smem [#allocation7], 0
    %230 = sst [smem:[%s229]] %s228
    // Predicated region
    $region22: #{tpu_custom_call.1} parent=1 // pred_check
      _
    $region23: #{tpu_custom_call.1} parent=1 // pred_check_branch
      %232 = sbr.rel (0) target = $region25
    $region24: #{tpu_custom_call.1} parent=1 // pred_region
      %s234 = ssub.s32 16, 16
      %235 = vsyncadd [#allocation4], %s234
      %238 = dma.smem_to_hbm [#allocation7], 16, %s3, [#allocation4]
    $region25: #{tpu_custom_call.1} parent=1 // pred_fallthru
      _
    // Predicated region
    $region26: #{tpu_custom_call.1} parent=1 // pred_check
      _
    $region27: #{tpu_custom_call.1} parent=1 // pred_check_branch
      %240 = sbr.rel (0) target = $region29
    $region28: #{tpu_custom_call.1} parent=1 // pred_region
      %241 = dma.done [#allocation4], 16
    $region29: #{tpu_custom_call.1} parent=1 // pred_fallthru
      _
    %242 = sfence
    %243 = vsyncpa [#allocation3], 1
    %244 = vsyncpa [#allocation6], 1
    %245 = vsyncpa [#allocation4], 1

</llo_original>
